<compile_context>
chip_gen: v5e
topology: v5e:2x2
jax: 0.10.0
libtpu: 0.0.40
codegen_flags: <defaults>
</compile_context>

<pallas_src>
import math

import jax
import jax.numpy as jnp
from jax.experimental import pallas as pl
from jax.experimental.pallas import tpu as pltpu


REG_TK = 8192  # flattened-D tile for the standalone regression kernel


def _round_up(x, m):
    return ((x + m - 1) // m) * m


def _pad_params(HW):
    HWp = _round_up(HW, 128)
    tm = 256 if HWp % 256 == 0 else 128
    return HWp, tm


# ----------------------------- Pallas kernels -----------------------------

def _feat_kernel(x_ref, w_ref, b_ref, o_ref):
    # x_ref: (1, Cin, T), w_ref: (C, Cin), b_ref: (C, 1), o_ref: (1, C, T)
    x = x_ref[0]                       # (Cin, T)
    w = w_ref[...]                     # (C, Cin)
    c_out = w.shape[0]
    t = x.shape[1]
    # Cin is tiny (3): do the 1x1 conv as VPU broadcast multiply-adds rather
    # than an MXU matmul with a degenerate contraction dimension.
    acc = jnp.zeros((c_out, t), jnp.float32)
    for ci in range(x.shape[0]):
        acc = acc + w[:, ci:ci + 1] * x[ci:ci + 1, :]
    acc = acc + b_ref[...]
    o_ref[0] = jnp.maximum(acc, 0.0).astype(o_ref.dtype)


def _normalized_corr(fa, fb):
    # fa: (HWk_pad, C) rows k = w*H + h (already transposed in the wrapper, so
    # the matmul is canonical (M,K)x(K,N)); fb: (C, TM) cols m = h*W + w.
    corr = jnp.dot(fa, fb, preferred_element_type=jnp.float32)   # (HWk, TM)
    corr = jnp.maximum(corr, 0.0)                                # ReLU
    # feature_L2_norm over the correlation-channel axis k (full k axis in the
    # block, so per-m-tile normalization is exact; padded k rows are exactly 0).
    inv = jax.lax.rsqrt(jnp.sum(corr * corr, axis=0, keepdims=True) + 1e-6)
    return corr * inv


def _sim_kernel(fa_ref, fb_ref, o_ref):
    o_ref[0] = _normalized_corr(fa_ref[0], fb_ref[0]).astype(o_ref.dtype)


def _fused_sim_reg_kernel(fa_ref, fb_ref, w_ref, b_ref, o_ref, acc_ref):
    # fa_ref: (1, HWk_pad, C), fb_ref: (1, C, TM)
    # w_ref:  (n_out, HWk_pad, TM) with w_ref[f, k, m] = reg_w[k*HW + m, f]
    # b_ref:  (1, n_out), o_ref: (1, 1, n_out), acc_ref: (1, n_out) f32
    j = pl.program_id(1)
    n_out = w_ref.shape[0]

    @pl.when(j == 0)
    def _():
        acc_ref[...] = jnp.zeros_like(acc_ref)

    corr = _normalized_corr(fa_ref[0], fb_ref[0])            # (HWk_pad, TM) f32

    # sum_{k,m} corr[k,m] * W[k,m,f]: per-f VPU multiply + sublane reduce,
    # then a single tiny MXU matvec against a ones row for the lane reduce.
    parts = [jnp.sum(corr * w_ref[f].astype(jnp.float32), axis=0, keepdims=True)
             for f in range(n_out)]                          # n_out x (1, TM)
    col = jnp.concatenate(parts, axis=0)                     # (n_out, TM)
    ones_row = jnp.ones((1, col.shape[1]), jnp.float32)
    tile_tot = jax.lax.dot_general(ones_row, col, (((1,), (1,)), ((), ())),
                                   preferred_element_type=jnp.float32)
    acc_ref[...] += tile_tot                                 # (1, n_out)

    @pl.when(j == pl.num_programs(1) - 1)
    def _():
        o_ref[0] = (acc_ref[...] + b_ref[...]).astype(o_ref.dtype)


def _reg_kernel(x_ref, w_ref, b_ref, o_ref, acc_ref):
    # reduction over the flattened D axis (grid axis 0, "arbitrary")
    @pl.when(pl.program_id(0) == 0)
    def _():
        acc_ref[...] = jnp.zeros_like(acc_ref)

    x = x_ref[...]
    w = w_ref[...]
    if x.dtype != w.dtype:
        x = x.astype(w.dtype)
    acc_ref[...] += jnp.dot(x, w, preferred_element_type=jnp.float32)

    @pl.when(pl.program_id(0) == pl.num_programs(0) - 1)
    def _():
        o_ref[...] = (acc_ref[...] + b_ref[...]).astype(o_ref.dtype)


# ----------------------------- wrappers -----------------------------------

def features_extractor_fwd(x_nchw, w, b, t=None):
    """Synthetic stand-in feature extractor: 1x1 conv + ReLU (NCHW)."""
    B, Cin, H, W = x_nchw.shape
    C = w.shape[0]
    HW = H * W
    HWp = _round_up(HW, 128)
    if t is None:
        t = HWp                      # one spatial tile per image (launch-bound stage)
    x = x_nchw.reshape(B, Cin, HW)
    x = jnp.pad(x, ((0, 0), (0, 0), (0, HWp - HW)))
    out = pl.pallas_call(
        _feat_kernel,
        out_shape=jax.ShapeDtypeStruct((B, C, HWp), x_nchw.dtype),
        grid=(B, HWp // t),
        in_specs=[pl.BlockSpec((1, Cin, t), lambda i, j: (i, 0, j)),
                  pl.BlockSpec((C, Cin), lambda i, j: (0, 0)),
                  pl.BlockSpec((C, 1), lambda i, j: (0, 0))],
        out_specs=pl.BlockSpec((1, C, t), lambda i, j: (i, 0, j)),
        compiler_params=pltpu.CompilerParams(
            dimension_semantics=("parallel", "parallel")),
    )(x, w, b.reshape(C, 1))
    return out[:, :, :HW].reshape(B, C, H, W)


def _prep_sim_pair(features_a, features_b, HWp):
    """fa is flattened with k = w*H + h (torch .transpose(2,3).view) and
    pre-transposed to (B, HWk, C); fb keeps m = h*W + w as (B, C, HWm)."""
    B, C, H, W = features_a.shape
    HW = H * W
    faT = jnp.transpose(features_a, (0, 3, 2, 1)).reshape(B, HW, C)
    fb = features_b.reshape(B, C, HW)
    faT = jnp.pad(faT, ((0, 0), (0, HWp - HW), (0, 0)))
    fb = jnp.pad(fb, ((0, 0), (0, 0), (0, HWp - HW)))
    return faT, fb


def _prep_sim_both_from_stacked(feats, B, HWp):
    """Both directions from stacked features [f1; f2]: fa rows = [f1T; f2T],
    fb rows = [f2; f1].  Single transpose / pad / half-swap."""
    N, C, H, W = feats.shape
    HW = H * W
    faT = jnp.transpose(feats, (0, 3, 2, 1)).reshape(N, HW, C)
    fb = feats.reshape(N, C, HW)
    fb = jnp.concatenate([fb[B:], fb[:B]], axis=0)
    faT = jnp.pad(faT, ((0, 0), (0, HWp - HW), (0, 0)))
    fb = jnp.pad(fb, ((0, 0), (0, 0), (0, HWp - HW)))
    return faT, fb


def _sim_pallas_call(faT, fb, out_dtype, tm):
    N, HWkp, C = faT.shape
    HWmp = fb.shape[2]
    return pl.pallas_call(
        _sim_kernel,
        out_shape=jax.ShapeDtypeStruct((N, HWkp, HWmp), out_dtype),
        grid=(N, HWmp // tm),
        in_specs=[pl.BlockSpec((1, HWkp, C), lambda b, j: (b, 0, 0)),
                  pl.BlockSpec((1, C, tm), lambda b, j: (b, 0, j))],
        out_specs=pl.BlockSpec((1, HWkp, tm), lambda b, j: (b, 0, j)),
        compiler_params=pltpu.CompilerParams(
            dimension_semantics=("parallel", "parallel")),
    )(faT, fb)


def compute_similarity(features_a, features_b):
    """Pallas version of the PyTorch compute_similarity (bmm + ReLU + L2 norm)."""
    B, C, H, W = features_a.shape
    HW = H * W
    HWp, tm = _pad_params(HW)
    faT, fb = _prep_sim_pair(features_a, features_b, HWp)
    corr = _sim_pallas_call(faT, fb, features_a.dtype, tm)
    return corr[:, :HW, :HW].reshape(B, HW, H, W)


def compute_similarity_both(features_1, features_2):
    """Both directions (1->2 and 2->1) in a single pallas_call (2B grid)."""
    B, C, H, W = features_1.shape
    HW = H * W
    HWp, tm = _pad_params(HW)
    feats = jnp.concatenate([features_1, features_2], axis=0)
    faT, fb = _prep_sim_both_from_stacked(feats, B, HWp)
    corr = _sim_pallas_call(faT, fb, features_1.dtype, tm)
    corr = corr[:, :HW, :HW].reshape(2 * B, HW, H, W)
    return corr[:B], corr[B:]


class GeoWarp:
    """JAX/Pallas mirror of the PyTorch GeoWarp dispatcher."""

    def __init__(self, feat_w, feat_b, reg_w, reg_b, weights_dtype=jnp.bfloat16):
        self.feat_w = feat_w
        self.feat_b = feat_b
        D, n_out = reg_w.shape
        HW = int(round(math.sqrt(D)))
        assert HW * HW == D, "regression weight must be (HW*HW, n_out)"
        self._HW, self._n_out = HW, n_out
        self._HWp, self._tm = _pad_params(HW)
        self.reg_b = jnp.asarray(reg_b, jnp.float32).reshape(1, n_out)

        # Pre-padded flat weight for the standalone regression kernel (avoids a
        # per-call pad copy of the ~3 MB weight); bf16 halves the HBM stream,
        # accumulation stays f32 in-kernel.
        self._D = D
        self._Dp = _round_up(D, REG_TK)
        self.reg_w_flat = jnp.pad(reg_w, ((0, self._Dp - D), (0, 0))).astype(weights_dtype)

        # Permuted + zero-padded weight for the fused similarity+regression
        # kernel: reg_w_perm[f, k, m] = reg_w[k*HW + m, f].  Padded (k, m)
        # positions correspond to exactly-zero corr entries, so zero-fill is safe.
        w_perm = jnp.transpose(reg_w.reshape(HW, HW, n_out), (2, 0, 1))
        w_perm = jnp.pad(w_perm, ((0, 0), (0, self._HWp - HW), (0, self._HWp - HW)))
        self.reg_w_perm = w_perm.astype(weights_dtype)

    # ---- backbones (stand-ins) --------------------------------------------
    def features_extractor(self, tensor_images, features_type='local'):
        # features_type is accepted but ignored (as in a 'local' extraction).
        del features_type
        return features_extractor_fwd(tensor_images, self.feat_w, self.feat_b)

    def homography_regression(self, similarity_matrix):
        B = similarity_matrix.shape[0]
        D = (similarity_matrix.shape[1] * similarity_matrix.shape[2]
             * similarity_matrix.shape[3])
        assert D == self._D
        n_out = self._n_out
        x = similarity_matrix.reshape(B, D)
        x = jnp.pad(x, ((0, 0), (0, self._Dp - D)))
        return pl.pallas_call(
            _reg_kernel,
            out_shape=jax.ShapeDtypeStruct((B, n_out), similarity_matrix.dtype),
            grid=(self._Dp // REG_TK,),
            in_specs=[pl.BlockSpec((B, REG_TK), lambda k: (0, k)),
                      pl.BlockSpec((REG_TK, n_out), lambda k: (k, 0)),
                      pl.BlockSpec((1, n_out), lambda k: (0, 0))],
            out_specs=pl.BlockSpec((B, n_out), lambda k: (0, 0)),
            scratch_shapes=[pltpu.VMEM((B, n_out), jnp.float32)],
            compiler_params=pltpu.CompilerParams(
                dimension_semantics=("arbitrary",)),
        )(x, self.reg_w_flat, self.reg_b)

    # ---- fused similarity + regression (never materializes corr in HBM) ----
    def _similarity_and_regression(self, tensor_img_1, tensor_img_2):
        B = tensor_img_1.shape[0]
        feats = self.features_extractor(
            jnp.concatenate([tensor_img_1, tensor_img_2], axis=0))
        _, C, H, W = feats.shape
        assert H * W == self._HW
        faT, fb = _prep_sim_both_from_stacked(feats, B, self._HWp)
        N, HWkp, _ = faT.shape
        HWmp = fb.shape[2]
        tm = self._tm
        n_out = self._n_out
        out = pl.pallas_call(
            _fused_sim_reg_kernel,
            out_shape=jax.ShapeDtypeStruct((N, 1, n_out), feats.dtype),
            grid=(N, HWmp // tm),
            in_specs=[pl.BlockSpec((1, HWkp, C), lambda b, j: (b, 0, 0)),
                      pl.BlockSpec((1, C, tm), lambda b, j: (b, 0, j)),
                      pl.BlockSpec((n_out, HWkp, tm), lambda b, j: (0, 0, j)),
                      pl.BlockSpec((1, n_out), lambda b, j: (0, 0))],
            out_specs=pl.BlockSpec((1, 1, n_out), lambda b, j: (b, 0, 0)),
            scratch_shapes=[pltpu.VMEM((1, n_out), jnp.float32)],
            compiler_params=pltpu.CompilerParams(
                dimension_semantics=("parallel", "arbitrary")),
        )(faT, fb, self.reg_w_perm, self.reg_b)
        out = out.reshape(N, n_out)
        return out[:B], out[B:]

    # ---- dispatcher ---------------------------------------------------------
    def forward(self, operation, args):
        assert operation in ['features_extractor', 'similarity', 'regression',
                             'similarity_and_regression']
        if operation == 'features_extractor':
            if isinstance(args, (tuple, list)) and len(args) == 2:
                tensor_images, features_type = args
                return self.features_extractor(tensor_images, features_type)
            return self.features_extractor(args, 'local')
        elif operation == 'similarity':
            tensor_img_1, tensor_img_2 = args
            return self.similarity(tensor_img_1, tensor_img_2)
        elif operation == 'regression':
            return self.regression(args)
        elif operation == 'similarity_and_regression':
            tensor_img_1, tensor_img_2 = args
            return self._similarity_and_regression(tensor_img_1, tensor_img_2)

    def similarity(self, tensor_img_1, tensor_img_2):
        B = tensor_img_1.shape[0]
        feats = self.features_extractor(
            jnp.concatenate([tensor_img_1, tensor_img_2], axis=0))
        _, C, H, W = feats.shape
        HW = H * W
        HWp, tm = _pad_params(HW)
        faT, fb = _prep_sim_both_from_stacked(feats, B, HWp)
        corr = _sim_pallas_call(faT, fb, feats.dtype, tm)
        corr = corr[:, :HW, :HW].reshape(2 * B, HW, H, W)
        return corr[:B], corr[B:]

    def regression(self, similarity_matrix):
        return self.homography_regression(similarity_matrix)


# ----------------------------- pure-JAX reference --------------------------

def _ref_feat(x, w, b):
    y = jnp.einsum('oc,bchw->bohw', w, x, precision='highest')
    return jnp.maximum(y + b[None, :, None, None], 0.0)


def _ref_similarity(fa, fb):
    b, c, h, w = fa.shape
    fa2 = jnp.transpose(fa, (0, 1, 3, 2)).reshape(b, c, h * w)
    fb2 = jnp.transpose(fb.reshape(b, c, h * w), (0, 2, 1))
    mul = jnp.einsum('bmc,bck->bmk', fb2, fa2, precision='highest')
    corr = jnp.transpose(mul.reshape(b, h, w, h * w), (0, 3, 1, 2))
    corr = jnp.maximum(corr, 0.0)
    norm = jnp.sqrt(jnp.sum(corr * corr, axis=1, keepdims=True) + 1e-6)
    return corr / norm


def _ref_reg(sim, w, b):
    return jnp.dot(sim.reshape(sim.shape[0], -1), w, precision='highest') + b


# --------------------------------- main -------------------------------------

if __name__ == "__main__":
    # small stand-in for (B, 3, H_img, W_img) -> 15x15 feature maps as in GeoWarp
    B, Cin, H, W = 2, 3, 15, 15
    C = 32                        # stand-in for 256 feature channels
    HW = H * W                    # 225, matching the real GeoWarp spatial size

    key = jax.random.PRNGKey(0)
    k1, k2, k3, k4, k5, k6 = jax.random.split(key, 6)

    img1 = jax.random.normal(k1, (B, Cin, H, W), dtype=jnp.float32)
    img2 = jax.random.normal(k2, (B, Cin, H, W), dtype=jnp.float32)

    feat_w = 0.5 * jax.random.normal(k3, (C, Cin), dtype=jnp.float32)
    feat_b = 0.1 * jax.random.normal(k4, (C,), dtype=jnp.float32)
    reg_w = 0.05 * jax.random.normal(k5, (HW * H * W, 16), dtype=jnp.float32)
    reg_b = 0.1 * jax.random.normal(k6, (16,), dtype=jnp.float32)

    net = GeoWarp(feat_w, feat_b, reg_w, reg_b)

    # full fused pipeline: similarity_and_regression
    reg_1to2, reg_2to1 = net.forward('similarity_and_regression', (img1, img2))
    jax.block_until_ready((reg_1to2, reg_2to1))
    assert reg_1to2.shape == (B, 16) and reg_2to1.shape == (B, 16)

    # 'similarity' alone
    sim_1to2, sim_2to1 = net.forward('similarity', (img1, img2))
    jax.block_until_ready((sim_1to2, sim_2to1))
    assert sim_1to2.shape == (B, HW, H, W)

    # 'regression' alone (standalone D-tiled kernel)
    reg_std = net.forward('regression', sim_1to2)
    jax.block_until_ready(reg_std)
    assert reg_std.shape == (B, 16)

    # 'features_extractor' alone
    feats1 = net.forward('features_extractor', img1)
    jax.block_until_ready(feats1)
    assert feats1.shape == (B, C, H, W)

    # reference check
    f1 = _ref_feat(img1, feat_w, feat_b)
    f2 = _ref_feat(img2, feat_w, feat_b)
    ref_sim_12 = _ref_similarity(f1, f2)
    ref_sim_21 = _ref_similarity(f2, f1)
    ref_reg_12 = _ref_reg(ref_sim_12, reg_w, reg_b)
    ref_reg_21 = _ref_reg(ref_sim_21, reg_w, reg_b)

    assert jnp.allclose(feats1, f1, rtol=2e-2, atol=2e-2)
    assert jnp.allclose(sim_1to2, ref_sim_12, rtol=2e-2, atol=2e-2)
    assert jnp.allclose(sim_2to1, ref_sim_21, rtol=2e-2, atol=2e-2)
    assert jnp.allclose(reg_1to2, ref_reg_12, rtol=2e-2, atol=2e-2)
    assert jnp.allclose(reg_2to1, ref_reg_21, rtol=2e-2, atol=2e-2)
    assert jnp.allclose(reg_std, ref_reg_12, rtol=2e-2, atol=2e-2)

    print("KERNEL_OK")
</pallas_src>

<mosaic_0001>
module attributes {stable_mosaic.version = 11 : i64} {
  func.func @_feat_kernel(%arg0: i32, %arg1: i32, %arg2: memref<1x3x256xf32, #tpu.memory_space<vmem>>, %arg3: memref<32x3xf32, #tpu.memory_space<vmem>>, %arg4: memref<32x1xf32, #tpu.memory_space<vmem>>, %arg5: memref<1x32x256xf32, #tpu.memory_space<vmem>>) attributes {dimension_semantics = [#tpu.dimension_semantics<parallel>, #tpu.dimension_semantics<parallel>], iteration_bounds = array<i64: 4, 1>, scalar_prefetch = 0 : i64, scratch_operands = 0 : i64, tpu.core_type = #tpu.core_type<tc>, window_params = [{transform_indices = @transform_0, window_bounds = array<i64: 1, 3, 256>}, {pipeline_mode = #tpu.pipeline_mode<synchronous>, transform_indices = @transform_1, window_bounds = array<i64: 32, 3>}, {pipeline_mode = #tpu.pipeline_mode<synchronous>, transform_indices = @transform_2, window_bounds = array<i64: 32, 1>}, {transform_indices = @transform_3, window_bounds = array<i64: 1, 32, 256>}]} {
    %c0 = arith.constant 0 : index
    %c0_0 = arith.constant 0 : index
    %c0_1 = arith.constant 0 : index
    %0 = vector.load %arg2[%c0, %c0_0, %c0_1] : memref<1x3x256xf32, #tpu.memory_space<vmem>>, vector<1x3x256xf32>
    %1 = vector.shape_cast %0 : vector<1x3x256xf32> to vector<3x256xf32>
    %c0_2 = arith.constant 0 : index
    %c0_3 = arith.constant 0 : index
    %2 = vector.load %arg3[%c0_2, %c0_3] : memref<32x3xf32, #tpu.memory_space<vmem>>, vector<32x3xf32>
    %cst = arith.constant 0.000000e+00 : f32
    %3 = vector.broadcast %cst : f32 to vector<32x256xf32>
    %4 = vector.extract_strided_slice %2 {offsets = [0, 0], sizes = [32, 1], strides = [1, 1]} : vector<32x3xf32> to vector<32x1xf32>
    %5 = vector.extract_strided_slice %1 {offsets = [0, 0], sizes = [1, 256], strides = [1, 1]} : vector<3x256xf32> to vector<1x256xf32>
    %6 = vector.broadcast %4 : vector<32x1xf32> to vector<32x256xf32>
    %7 = vector.broadcast %5 : vector<1x256xf32> to vector<32x256xf32>
    %8 = arith.mulf %6, %7 : vector<32x256xf32>
    %9 = arith.addf %3, %8 : vector<32x256xf32>
    %10 = vector.extract_strided_slice %2 {offsets = [0, 1], sizes = [32, 1], strides = [1, 1]} : vector<32x3xf32> to vector<32x1xf32>
    %11 = vector.extract_strided_slice %1 {offsets = [1, 0], sizes = [1, 256], strides = [1, 1]} : vector<3x256xf32> to vector<1x256xf32>
    %12 = vector.broadcast %10 : vector<32x1xf32> to vector<32x256xf32>
    %13 = vector.broadcast %11 : vector<1x256xf32> to vector<32x256xf32>
    %14 = arith.mulf %12, %13 : vector<32x256xf32>
    %15 = arith.addf %9, %14 : vector<32x256xf32>
    %16 = vector.extract_strided_slice %2 {offsets = [0, 2], sizes = [32, 1], strides = [1, 1]} : vector<32x3xf32> to vector<32x1xf32>
    %17 = vector.extract_strided_slice %1 {offsets = [2, 0], sizes = [1, 256], strides = [1, 1]} : vector<3x256xf32> to vector<1x256xf32>
    %18 = vector.broadcast %16 : vector<32x1xf32> to vector<32x256xf32>
    %19 = vector.broadcast %17 : vector<1x256xf32> to vector<32x256xf32>
    %20 = arith.mulf %18, %19 : vector<32x256xf32>
    %21 = arith.addf %15, %20 : vector<32x256xf32>
    %c0_4 = arith.constant 0 : index
    %c0_5 = arith.constant 0 : index
    %22 = vector.load %arg4[%c0_4, %c0_5] : memref<32x1xf32, #tpu.memory_space<vmem>>, vector<32x1xf32>
    %23 = vector.broadcast %22 : vector<32x1xf32> to vector<32x256xf32>
    %24 = arith.addf %21, %23 : vector<32x256xf32>
    %cst_6 = arith.constant 0.000000e+00 : f32
    %25 = vector.broadcast %cst_6 : f32 to vector<32x256xf32>
    %26 = arith.maximumf %24, %25 : vector<32x256xf32>
    %c0_7 = arith.constant 0 : index
    %c0_8 = arith.constant 0 : index
    %c0_9 = arith.constant 0 : index
    %27 = vector.load %arg5[%c0_7, %c0_8, %c0_9] : memref<1x32x256xf32, #tpu.memory_space<vmem>>, vector<1x32x256xf32>
    %28 = vector.shape_cast %27 : vector<1x32x256xf32> to vector<32x256xf32>
    %29 = vector.shape_cast %26 : vector<32x256xf32> to vector<1x32x256xf32>
    tpu.vector_store %arg5[%c0_7, %c0_8, %c0_9], %29 {strides = array<i32>} : memref<1x32x256xf32, #tpu.memory_space<vmem>>, vector<1x32x256xf32>,
    return
  }
  func.func @transform_0(%arg0: i32, %arg1: i32) -> (i32, i32, i32) {
    %c0_i32 = arith.constant 0 : i32
    %c0_i32_0 = arith.constant 0 : i32
    return %arg0, %c0_i32, %arg1 : i32, i32, i32
  }
  func.func @transform_1(%arg0: i32, %arg1: i32) -> (i32, i32) {
    %c0_i32 = arith.constant 0 : i32
    %c0_i32_0 = arith.constant 0 : i32
    %c0_i32_1 = arith.constant 0 : i32
    return %c0_i32, %c0_i32_0 : i32, i32
  }
  func.func @transform_2(%arg0: i32, %arg1: i32) -> (i32, i32) {
    %c0_i32 = arith.constant 0 : i32
    %c0_i32_0 = arith.constant 0 : i32
    %c0_i32_1 = arith.constant 0 : i32
    return %c0_i32, %c0_i32_0 : i32, i32
  }
  func.func @transform_3(%arg0: i32, %arg1: i32) -> (i32, i32, i32) {
    %c0_i32 = arith.constant 0 : i32
    %c0_i32_0 = arith.constant 0 : i32
    return %arg0, %c0_i32, %arg1 : i32, i32, i32
  }
}

</mosaic_0001>

<llo_original>
// kernel: tpu_custom_call.1
$region0: #{tpu_custom_call.1}
  #allocation0 [shape = 'u32[]', space=smem, size = 0x4, offset = 0x4, fixed_abs, tag = 'smem constant byte address 0x4 - core index']
  #allocation1 [shape = 'u32[72,128]{1,0:T(1,128)}', space=vmem, size = 0x9000, scoped, tag = 'internal scratch']
  %s0 = inlined_call_operand.vmem [shape: f32[4,3,256], index: 0, kind: input, shape index: {}]
  %s1 = inlined_call_operand.vmem [shape: f32[32,3], index: 1, kind: input, shape index: {}]
  %s2 = inlined_call_operand.vmem [shape: f32[32,1], index: 2, kind: input, shape index: {}]
  %s3 = inlined_call_operand.hbm [shape: f32[4,32,256], index: 3, kind: output, shape index: {}]
  %s4 = sld [smem:[#allocation0]]
  $region45: #{tpu_custom_call.1} parent=0
    _
  %s6 = ssub.s32 1, %s4
  %s7 = scalar_select 0, %s6, %s4
  $region1: #{tpu_custom_call.1} parent=0
    #allocation2 [shape = 'u8[65536]{0}', space=vmem, size = 0x10000, scoped, tag = 'output window, operand 0']
    #allocation3 [shape = 's32[2]{0}', space=sflag, size = 0x8, scoped, tag = 'scoped memory for tpu_custom_call.1']
    %8 = vsyncpa [#allocation3], 0
    %s9 = scalar_lea.sflag [#allocation3], 1
    %10 = vsyncpa %s9, 0
    loop: start=0, step=1, limit=6
    $region2: #{tpu_custom_call.1} parent=1 // loop_pre_header
      _
    $region3: #{tpu_custom_call.1} parent=1 // loop_header
      %s12 = sphi 0, %s16
      %p13 = scmp.ge.s32.totalorder %s12, 6
      %s19 = sphi 0, %s31
      %s20 = sphi 0, %s27
      %s21 = sphi 0, %s19
      %s22 = sphi 0, %s20
      %s23 = sphi 0, %s21
      %s24 = sphi 0, %s22
      %s36 = sphi 0, %s38
      %s39 = sphi 0, %s36
      %s40 = sphi 0, %s39
      %s56 = sphi 0, %s40
      %s60 = sphi 0, %s60
      %s62 = sphi 0, %s60
      %s63 = sphi 0, %s62
      %s77 = sphi 0, %s63
      %s81 = sphi 0, %s81
      %s83 = sphi 0, %s81
      %s84 = sphi 0, %s83
      %s98 = sphi 0, %s84
      %s106 = sphi 0, %s108
      %s109 = sphi 0, %s106
      %s110 = sphi 0, %s109
      %s126 = sphi 0, %s110
    $region4: #{tpu_custom_call.1} parent=1 // loop_header_branch
      %15 = sbr.rel (%p13) target = $region8
    $region5: #{tpu_custom_call.1} parent=1 // loop_body
      %s17 = ssub.s32 %s12, 1
      %s18 = ssub.s32 %s12, 2
      %s25 = sadd.s32 1, %s20
      %p26 = scmp.ge.s32.totalorder %s25, 1
      %s27 = scalar_select %p26, 0, %s25
      %s28 = sadd.s32 1, %s19
      %s29 = scalar_select %p26, %s28, %s19
      %p30 = scmp.ge.s32.totalorder %s29, 4
      %s31 = scalar_select %p30, 0, %s29
      %s32 = ssub.s32 %s19, %s31
      %s33 = ssub.s32 %s20, %s27
      %s34 = sor.u32 %s32, %s33
      %p35 = scmp.eq.s32.totalorder %s34, 0
      %s37 = sadd.s32 %s36, 1
      %s38 = scalar_select %p35, %s36, %s37
      %p41 = pneg %p35
      %p42 = scmp.eq.s32.totalorder %s12, 3
      %p43 = por %p41, %p42
      %p44 = scmp.ne.s32.totalorder %s36, %s39
      %p45 = scmp.eq.s32.totalorder %s12, 0
      %p46 = por %p44, %p45
      %p47 = scmp.ne.s32.totalorder %s36, %s39
      %p48 = scmp.eq.s32.totalorder %s17, 3
      %p49 = por %p47, %p48
      %p50 = scmp.ne.s32.totalorder %s39, %s40
      %p51 = scmp.eq.s32.totalorder %s17, 0
      %p52 = por %p50, %p51
      %p53 = scmp.ne.s32.totalorder %s39, %s40
      %p54 = scmp.eq.s32.totalorder %s18, 3
      %p55 = por %p53, %p54
      %p57 = scmp.ne.s32.totalorder %s40, %s56
      %p58 = scmp.eq.s32.totalorder %s18, 0
      %p59 = por %p57, %p58
      %s61 = sadd.s32 %s60, 1
      %p64 = scmp.eq.s32.totalorder %s12, 3
      %p65 = scmp.ne.s32.totalorder %s60, %s62
      %p66 = scmp.eq.s32.totalorder %s12, 0
      %p67 = por %p65, %p66
      %p68 = scmp.ne.s32.totalorder %s60, %s62
      %p69 = scmp.eq.s32.totalorder %s17, 3
      %p70 = por %p68, %p69
      %p71 = scmp.ne.s32.totalorder %s62, %s63
      %p72 = scmp.eq.s32.totalorder %s17, 0
      %p73 = por %p71, %p72
      %p74 = scmp.ne.s32.totalorder %s62, %s63
      %p75 = scmp.eq.s32.totalorder %s18, 3
      %p76 = por %p74, %p75
      %p78 = scmp.ne.s32.totalorder %s63, %s77
      %p79 = scmp.eq.s32.totalorder %s18, 0
      %p80 = por %p78, %p79
      %s82 = sadd.s32 %s81, 1
      %p85 = scmp.eq.s32.totalorder %s12, 3
      %p86 = scmp.ne.s32.totalorder %s81, %s83
      %p87 = scmp.eq.s32.totalorder %s12, 0
      %p88 = por %p86, %p87
      %p89 = scmp.ne.s32.totalorder %s81, %s83
      %p90 = scmp.eq.s32.totalorder %s17, 3
      %p91 = por %p89, %p90
      %p92 = scmp.ne.s32.totalorder %s83, %s84
      %p93 = scmp.eq.s32.totalorder %s17, 0
      %p94 = por %p92, %p93
      %p95 = scmp.ne.s32.totalorder %s83, %s84
      %p96 = scmp.eq.s32.totalorder %s18, 3
      %p97 = por %p95, %p96
      %p99 = scmp.ne.s32.totalorder %s84, %s98
      %p100 = scmp.eq.s32.totalorder %s18, 0
      %p101 = por %p99, %p100
      %s102 = ssub.s32 %s19, %s31
      %s103 = ssub.s32 %s20, %s27
      %s104 = sor.u32 %s102, %s103
      %p105 = scmp.eq.s32.totalorder %s104, 0
      %s107 = sadd.s32 %s106, 1
      %s108 = scalar_select %p105, %s106, %s107
      %p111 = pneg %p105
      %p112 = scmp.eq.s32.totalorder %s12, 3
      %p113 = por %p111, %p112
      %p114 = scmp.ne.s32.totalorder %s106, %s109
      %p115 = scmp.eq.s32.totalorder %s12, 0
      %p116 = por %p114, %p115
      %p117 = scmp.ne.s32.totalorder %s106, %s109
      %p118 = scmp.eq.s32.totalorder %s17, 3
      %p119 = por %p117, %p118
      %p120 = scmp.ne.s32.totalorder %s109, %s110
      %p121 = scmp.eq.s32.totalorder %s17, 0
      %p122 = por %p120, %p121
      %p123 = scmp.ne.s32.totalorder %s109, %s110
      %p124 = scmp.eq.s32.totalorder %s18, 3
      %p125 = por %p123, %p124
      %p127 = scmp.ne.s32.totalorder %s110, %s126
      %p128 = scmp.eq.s32.totalorder %s18, 0
      %p129 = por %p127, %p128
      %p130 = scmp.le.s32.totalorder 1, %s12
      %p131 = scmp.lt.s32.totalorder %s12, 5
      %p132 = pnand %p130, %p131
      %p133 = pneg %p132
      // Predicated region
      $region9: #{tpu_custom_call.1} parent=5 // pred_check
        _
      $region10: #{tpu_custom_call.1} parent=5 // pred_check_branch
        %135 = sbr.rel (%p132) target = $region12
      $region11: #{tpu_custom_call.1} parent=5 // pred_region
        %s136 = ssub.s32 %s12, 1
        // Predicated region
        $region13: #{tpu_custom_call.1} parent=11 // pred_check
          %p137 = pneg %p73
        $region14: #{tpu_custom_call.1} parent=11 // pred_check_branch
          %139 = sbr.rel (%p137) target = $region16
        $region15: #{tpu_custom_call.1} parent=11 // pred_region
          _
        $region16: #{tpu_custom_call.1} parent=11 // pred_fallthru
          _
        // Predicated region
        $region17: #{tpu_custom_call.1} parent=11 // pred_check
          %p140 = pneg %p94
        $region18: #{tpu_custom_call.1} parent=11 // pred_check_branch
          %142 = sbr.rel (%p140) target = $region20
        $region19: #{tpu_custom_call.1} parent=11 // pred_region
          _
        $region20: #{tpu_custom_call.1} parent=11 // pred_fallthru
          _
      $region12: #{tpu_custom_call.1} parent=5 // pred_fallthru
        _
      %p143 = scmp.lt.s32.totalorder %s12, 4
      // Predicated region
      $region21: #{tpu_custom_call.1} parent=5 // pred_check
        %p144 = pneg %p143
      $region22: #{tpu_custom_call.1} parent=5 // pred_check_branch
        %146 = sbr.rel (%p144) target = $region24
      $region23: #{tpu_custom_call.1} parent=5 // pred_region
        // Predicated region
        $region25: #{tpu_custom_call.1} parent=23 // pred_check
          %p147 = pneg %p46
        $region26: #{tpu_custom_call.1} parent=23 // pred_check_branch
          %149 = sbr.rel (%p147) target = $region28
        $region27: #{tpu_custom_call.1} parent=23 // pred_region
          %s150 = smul.u32 2, %s20
          %p151 = scmp.lt.s32.totalorder %s19, 3
          %s152 = scalar_select %p151, %s19, 3
          %p153 = scmp.lt.s32.totalorder %s150, 1
          %s154 = scalar_select %p153, %s150, 1
          %s155 = smul.addr %s152, 2
          %s156 = sadd.s32 %s154, %s155
          %s157 = smul.addr %s156, 4
          %s158 = scalar_lea.vmem %s0, %s157
          %s159 = smul.u32 2, %s20
        $region28: #{tpu_custom_call.1} parent=23 // pred_fallthru
          _
      $region24: #{tpu_custom_call.1} parent=5 // pred_fallthru
        _
      %p160 = scmp.le.s32.totalorder 1, %s12
      %p161 = scmp.lt.s32.totalorder %s12, 5
      %p162 = pnand %p160, %p161
      %p163 = pneg %p162
      // Predicated region
      $region29: #{tpu_custom_call.1} parent=5 // pred_check
        _
      $region30: #{tpu_custom_call.1} parent=5 // pred_check_branch
        %165 = sbr.rel (%p162) target = $region32
      $region31: #{tpu_custom_call.1} parent=5 // pred_region
        %s166 = ssub.s32 %s12, 1
        %s167 = smul.u32 2, %s22
        %p168 = scmp.lt.s32.totalorder %s21, 3
        %s169 = scalar_select %p168, %s21, 3
        %p170 = scmp.lt.s32.totalorder %s167, 1
        %s171 = scalar_select %p170, %s167, 1
        %s172 = smul.addr %s169, 2
        %s173 = sadd.s32 %s171, %s172
        %s174 = smul.addr %s173, 4
        %s175 = scalar_lea.vmem %s0, %s174
        %p176 = pneg %p52
        %p177 = pneg %p49
        %p178 = pneg %p73
        %p179 = pneg %p70
        %p180 = pneg %p94
        %p181 = pneg %p91
        %p182 = pneg %p122
        %p183 = pneg %p119
        %s184 = sand.u32 %s109, 1
        %s185 = scalar_lea.sflag [#allocation3], %s184
        %s186 = sand.u32 %s109, 1
        %s187 = smul.addr %s186, 64
        %s188 = scalar_lea.vmem [#allocation2], %s187
        %s189 = smul.u32 2, %s22
        %p190 = scmp.lt.s32.totalorder %s21, 3
        %s191 = scalar_select %p190, %s21, 3
        %p192 = scmp.lt.s32.totalorder %s189, 1
        %s193 = scalar_select %p192, %s189, 1
        %s194 = smul.addr %s191, 2
        %s195 = sadd.s32 %s193, %s194
        %s196 = smul.addr %s195, 4
        %s197 = scalar_lea.vmem %s0, %s196
        %s198 = smul.u32 2, %s22
        %s199 = smul.u32 2, %s22
        %v200 = vld [vmem:[%s197] sm:$0x77]
        %v201 = vld [vmem:[%s1] sm:$0xff]
        %v202 = vld [vmem:[%s1 + $0x8] sm:$0xff]
        %v203 = vld [vmem:[%s1 + $0x10] sm:$0xff]
        %v204 = vld [vmem:[%s1 + $0x18] sm:$0xff]
        %206 = vset.pattern.permute.xlu0 0
        %207 = vperm.xlu0 %206, %v201
        %v208 = vpop.permute.xlu0 %207
        %211 = vset.pattern.permute.xlu0 0
        %212 = vperm.xlu0 %211, %v202
        %v213 = vpop.permute.xlu0 %212
        %216 = vset.pattern.permute.xlu0 0
        %217 = vperm.xlu0 %216, %v203
        %v218 = vpop.permute.xlu0 %217
        %221 = vset.pattern.permute.xlu0 0
        %222 = vperm.xlu0 %221, %v204
        %v223 = vpop.permute.xlu0 %222
        %v226 = vperm.slane %v200, 0
        %v227 = vperm.slane %v200, 4
        %v230 = vperm.slane %v226, 0
        %v231 = vperm.slane %v227, 0
        %v232 = vmul.f32 %v208, %v230
        %v233 = vmul.f32 %v208, %v231
        %v234 = vmul.f32 %v213, %v230
        %v235 = vmul.f32 %v213, %v231
        %v236 = vmul.f32 %v218, %v230
        %v237 = vmul.f32 %v218, %v231
        %v238 = vmul.f32 %v223, %v230
        %v239 = vmul.f32 %v223, %v231
        %v240 = vadd.f32 %v232, 0.0
        %v241 = vadd.f32 %v233, 0.0
        %v242 = vadd.f32 %v234, 0.0
        %v243 = vadd.f32 %v235, 0.0
        %v244 = vadd.f32 %v236, 0.0
        %v245 = vadd.f32 %v237, 0.0
        %v246 = vadd.f32 %v238, 0.0
        %v247 = vadd.f32 %v239, 0.0
        %248 = vset.pattern.permute.xlu0 1
        %249 = vperm.xlu0 %248, %v201
        %v250 = vpop.permute.xlu0 %249
        %252 = vset.pattern.permute.xlu0 1
        %253 = vperm.xlu0 %252, %v202
        %v254 = vpop.permute.xlu0 %253
        %256 = vset.pattern.permute.xlu0 1
        %257 = vperm.xlu0 %256, %v203
        %v258 = vpop.permute.xlu0 %257
        %260 = vset.pattern.permute.xlu0 1
        %261 = vperm.xlu0 %260, %v204
        %v262 = vpop.permute.xlu0 %261
        %v264 = vperm.slane %v200, 1
        %v265 = vperm.slane %v200, 5
        %v268 = vperm.slane %v264, 1
        %v269 = vperm.slane %v265, 1
        %v270 = vmul.f32 %v250, %v268
        %v271 = vmul.f32 %v250, %v269
        %v272 = vmul.f32 %v254, %v268
        %v273 = vmul.f32 %v254, %v269
        %v274 = vmul.f32 %v258, %v268
        %v275 = vmul.f32 %v258, %v269
        %v276 = vmul.f32 %v262, %v268
        %v277 = vmul.f32 %v262, %v269
        %v278 = vadd.f32 %v240, %v270
        %v279 = vadd.f32 %v241, %v271
        %v280 = vadd.f32 %v242, %v272
        %v281 = vadd.f32 %v243, %v273
        %v282 = vadd.f32 %v244, %v274
        %v283 = vadd.f32 %v245, %v275
        %v284 = vadd.f32 %v246, %v276
        %v285 = vadd.f32 %v247, %v277
        %286 = vset.pattern.permute.xlu0 2
        %287 = vperm.xlu0 %286, %v201
        %v288 = vpop.permute.xlu0 %287
        %290 = vset.pattern.permute.xlu0 2
        %291 = vperm.xlu0 %290, %v202
        %v292 = vpop.permute.xlu0 %291
        %294 = vset.pattern.permute.xlu0 2
        %295 = vperm.xlu0 %294, %v203
        %v296 = vpop.permute.xlu0 %295
        %298 = vset.pattern.permute.xlu0 2
        %299 = vperm.xlu0 %298, %v204
        %v300 = vpop.permute.xlu0 %299
        %v302 = vperm.slane %v200, 2
        %v303 = vperm.slane %v200, 6
        %v306 = vperm.slane %v302, 2
        %v307 = vperm.slane %v303, 2
        %v308 = vmul.f32 %v288, %v306
        %v309 = vmul.f32 %v288, %v307
        %v310 = vmul.f32 %v292, %v306
        %v311 = vmul.f32 %v292, %v307
        %v312 = vmul.f32 %v296, %v306
        %v313 = vmul.f32 %v296, %v307
        %v314 = vmul.f32 %v300, %v306
        %v315 = vmul.f32 %v300, %v307
        %v316 = vadd.f32 %v278, %v308
        %v317 = vadd.f32 %v279, %v309
        %v318 = vadd.f32 %v280, %v310
        %v319 = vadd.f32 %v281, %v311
        %v320 = vadd.f32 %v282, %v312
        %v321 = vadd.f32 %v283, %v313
        %v322 = vadd.f32 %v284, %v314
        %v323 = vadd.f32 %v285, %v315
        %v324 = vld [vmem:[%s2] sm:$0xff]
        %v325 = vld [vmem:[%s2 + $0x8] sm:$0xff]
        %v326 = vld [vmem:[%s2 + $0x10] sm:$0xff]
        %v327 = vld [vmem:[%s2 + $0x18] sm:$0xff]
        %329 = vset.pattern.permute.xlu0 0
        %330 = vperm.xlu0 %329, %v324
        %v331 = vpop.permute.xlu0 %330
        %334 = vset.pattern.permute.xlu0 0
        %335 = vperm.xlu0 %334, %v325
        %v336 = vpop.permute.xlu0 %335
        %339 = vset.pattern.permute.xlu0 0
        %340 = vperm.xlu0 %339, %v326
        %v341 = vpop.permute.xlu0 %340
        %344 = vset.pattern.permute.xlu0 0
        %345 = vperm.xlu0 %344, %v327
        %v346 = vpop.permute.xlu0 %345
        %v348 = vadd.f32 %v316, %v331
        %v349 = vadd.f32 %v317, %v331
        %v350 = vadd.f32 %v318, %v336
        %v351 = vadd.f32 %v319, %v336
        %v352 = vadd.f32 %v320, %v341
        %v353 = vadd.f32 %v321, %v341
        %v354 = vadd.f32 %v322, %v346
        %v355 = vadd.f32 %v323, %v346
        %v356 = vmax.f32 %v348, 0.0
        %v357 = vmax.f32 %v349, 0.0
        %v358 = vmax.f32 %v350, 0.0
        %v359 = vmax.f32 %v351, 0.0
        %v360 = vmax.f32 %v352, 0.0
        %v361 = vmax.f32 %v353, 0.0
        %v362 = vmax.f32 %v354, 0.0
        %v363 = vmax.f32 %v355, 0.0
        %364 = vst [vmem:[%s188] sm:$0xff] %v356
        %365 = vst [vmem:[%s188 + $0x8] sm:$0xff] %v357
        %366 = vst [vmem:[%s188 + $0x10] sm:$0xff] %v358
        %367 = vst [vmem:[%s188 + $0x18] sm:$0xff] %v359
        %368 = vst [vmem:[%s188 + $0x20] sm:$0xff] %v360
        %369 = vst [vmem:[%s188 + $0x28] sm:$0xff] %v361
        %370 = vst [vmem:[%s188 + $0x30] sm:$0xff] %v362
        %371 = vst [vmem:[%s188 + $0x38] sm:$0xff] %v363
        %s372 = sand.u32 %s109, 1
        %s373 = scalar_lea.sflag [#allocation3], %s372
        %s374 = sand.u32 %s109, 1
        %s375 = smul.addr %s374, 64
        %s376 = scalar_lea.vmem [#allocation2], %s375
        // Predicated region
        $region33: #{tpu_custom_call.1} parent=31 // pred_check
          %p377 = pneg %p119
        $region34: #{tpu_custom_call.1} parent=31 // pred_check_branch
          %379 = sbr.rel (%p377) target = $region36
        $region35: #{tpu_custom_call.1} parent=31 // pred_region
          %s380 = smul.u32 2, %s22
          %382 = vsyncadd %s373, 0
          %s383 = smul.addr %s21, 8
          %s384 = sadd.s32 %s380, %s383
          %s385 = smul.addr %s384, 8
          %s386 = scalar_lea.hbm %s3, %s385
          %s387 = sshll.u32 %s376, 4
          %s388 = int_to_ptr.vmem [resolvable:$true] %s387
          %s389 = sshll.u32 %s386, 4
          %s390 = int_to_ptr.hbm [resolvable:$true] %s389
          %395 = dma.vmem_to_hbm [thread:$0]  %s388, 1024, %s390, %s373, 256, 256, 16
        $region36: #{tpu_custom_call.1} parent=31 // pred_fallthru
          _
      $region32: #{tpu_custom_call.1} parent=5 // pred_fallthru
        _
      %p396 = scmp.le.s32.totalorder 2, %s12
      // Predicated region
      $region37: #{tpu_custom_call.1} parent=5 // pred_check
        %p397 = pneg %p396
      $region38: #{tpu_custom_call.1} parent=5 // pred_check_branch
        %399 = sbr.rel (%p397) target = $region40
      $region39: #{tpu_custom_call.1} parent=5 // pred_region
        %s400 = ssub.s32 %s12, 2
        // Predicated region
        $region41: #{tpu_custom_call.1} parent=39 // pred_check
          %p401 = pneg %p125
        $region42: #{tpu_custom_call.1} parent=39 // pred_check_branch
          %403 = sbr.rel (%p401) target = $region44
        $region43: #{tpu_custom_call.1} parent=39 // pred_region
          %s404 = sand.u32 %s110, 1
          %s405 = scalar_lea.sflag [#allocation3], %s404
          %s406 = sand.u32 %s110, 1
          %s407 = smul.addr %s406, 64
          %s408 = scalar_lea.vmem [#allocation2], %s407
          %410 = dma.done %s405, 1024
        $region44: #{tpu_custom_call.1} parent=39 // pred_fallthru
          _
      $region40: #{tpu_custom_call.1} parent=5 // pred_fallthru
        _
    $region6: #{tpu_custom_call.1} parent=1 // loop_footer
      %s16 = sadd.s32 1, %s12
    $region7: #{tpu_custom_call.1} parent=1 // loop_footer_branch
      %11 = sbr.rel target = $region3
    $region8: #{tpu_custom_call.1} parent=1 // loop_exit
      _
    %411 = vsyncpa [#allocation3], 1
    %s412 = scalar_lea.sflag [#allocation3], 1
    %413 = vsyncpa %s412, 1

</llo_original>
